<compile_context>
chip_gen: v5e
topology: v5e:2x2
jax: 0.10.0
libtpu: 0.0.40
codegen_flags: <defaults>
</compile_context>

<pallas_src>
import math
from functools import partial

import numpy as np
import jax
import jax.numpy as jnp
from jax.experimental import pallas as pl
from jax.experimental.pallas import tpu as pltpu


# ----------------------------------------------------------------------------
# Fused kernel: 1x1 conv + BN + ReLU  ->  3x3 depthwise + BN + ReLU  -> concat
# ----------------------------------------------------------------------------
def _ghost_fused_kernel(x_ref, xprev_ref, xnext_ref, w1_ref, s1_ref, b1_ref,
                        wdw_ref, s2_ref, b2_ref, o_ref, *,
                        th, W, cinit, K, r1, relu):
    i = pl.program_id(1)
    last = pl.num_programs(1) - 1

    w1 = w1_ref[...]                     # (Cin, cinit)
    s1 = s1_ref[...]                     # (1, cinit)
    b1 = b1_ref[...]

    def primary(x2d):                    # (M, Cin) -> (M, cinit), f32, MXU
        y = jnp.dot(x2d.astype(jnp.float32), w1,
                    preferred_element_type=jnp.float32)
        y = y * s1 + b1
        return jnp.maximum(y, 0.0) if relu else y

    cin = x_ref.shape[-1]
    x_main = x_ref[0]                                        # (th, W, cin)
    x1_main = primary(x_main.reshape(th * W, cin)).reshape(th, W, cinit)

    # Halo rows: recomputed from the neighbour tiles' input rows; zeroed at the
    # image edges to reproduce the depthwise conv's zero padding on x1.
    x1_prev = primary(xprev_ref[0, 0])                       # (W, cinit)
    x1_next = primary(xnext_ref[0, 0])
    x1_prev = jnp.where(i > 0, x1_prev, 0.0)
    x1_next = jnp.where(i < last, x1_next, 0.0)

    # Padded-in-rows x1 tile, resident in VMEM.
    x1p = jnp.concatenate([x1_prev[None], x1_main, x1_next[None]],
                          axis=0)                            # (th+2, W, cinit)

    # Column-shifted views with zero padding at the W edges (built once).
    zcol = jnp.zeros((th + 2, 1, cinit), jnp.float32)
    x1_l = jnp.concatenate([zcol, x1p[:, :W - 1, :]], axis=1)  # col w -> x1p[:, w-1]
    x1_r = jnp.concatenate([x1p[:, 1:, :], zcol], axis=1)      # col w -> x1p[:, w+1]
    shifted = (x1_l, x1p, x1_r)                                # indexed by kw

    wdw = wdw_ref[...]                   # (r1, K*K, cinit)
    s2 = s2_ref[...]                     # (r1, cinit)
    b2 = b2_ref[...]

    # x1 -> first cinit channels of the concatenated output.
    o_ref[0, :, :, 0:cinit] = x1_main.astype(o_ref.dtype)

    # Depthwise 3x3: one (r1) pass per ghost copy; weights pre-arranged so the
    # channel (lane) layout of the taps matches x1 (no activation replication).
    x2_parts = []
    for j in range(r1):
        acc = jnp.zeros((th, W, cinit), jnp.float32)
        for kh in range(K):
            for kw in range(K):
                acc = acc + shifted[kw][kh:kh + th] * wdw[j, kh * K + kw]
        y = acc * s2[j] + b2[j]
        x2_parts.append(jnp.maximum(y, 0.0) if relu else y)

    if r1 == 1:
        x2 = x2_parts[0]
    else:
        # interleave (g, j) -> channel g*r1 + j (grouped-conv output ordering)
        x2 = jnp.stack(x2_parts, axis=-1).reshape(th, W, cinit * r1)

    o_ref[0, :, :, cinit:cinit + cinit * r1] = x2.astype(o_ref.dtype)


# ----------------------------------------------------------------------------
# pallas_call wrapper
# ----------------------------------------------------------------------------
def _auto_row_tile(H, W, cin, cinit, ratio, budget_bytes=4 << 20):
    # rough f32 bytes of VMEM-resident data per output row inside the kernel
    per_row = 4 * W * (cin + cinit * (ratio + 5))
    target = max(1, budget_bytes // max(per_row, 1))
    best = 1
    for d in range(1, H + 1):
        if H % d == 0 and d <= target:
            best = d
    return best


def _ghost_fused_call(x, w1, s1, b1, wdw_r, s2_r, b2_r, *, K, ratio, th,
                      init_channels, new_channels, relu):
    N, H, W, Cin = x.shape
    r1 = ratio - 1
    ctot = init_channels + new_channels
    n_row_tiles = H // th

    kernel = partial(_ghost_fused_kernel, th=th, W=W, cinit=init_channels,
                     K=K, r1=r1, relu=relu)

    return pl.pallas_call(
        kernel,
        out_shape=jax.ShapeDtypeStruct((N, H, W, ctot), jnp.float32),
        grid_spec=pltpu.PrefetchScalarGridSpec(
            num_scalar_prefetch=0,
            grid=(N, n_row_tiles),
            in_specs=[
                # main tile rows
                pl.BlockSpec((1, th, W, Cin), lambda n, i: (n, i, 0, 0)),
                # 1-row halos (clamped at the image edge; zeroed in-kernel)
                pl.BlockSpec((1, 1, W, Cin),
                             lambda n, i: (n, jnp.maximum(i * th - 1, 0), 0, 0)),
                pl.BlockSpec((1, 1, W, Cin),
                             lambda n, i: (n, jnp.minimum((i + 1) * th, H - 1), 0, 0)),
                # parameters (block index constant -> stay resident in VMEM)
                pl.BlockSpec((Cin, init_channels), lambda n, i: (0, 0)),
                pl.BlockSpec((1, init_channels), lambda n, i: (0, 0)),
                pl.BlockSpec((1, init_channels), lambda n, i: (0, 0)),
                pl.BlockSpec((r1, K * K, init_channels), lambda n, i: (0, 0, 0)),
                pl.BlockSpec((r1, init_channels), lambda n, i: (0, 0)),
                pl.BlockSpec((r1, init_channels), lambda n, i: (0, 0)),
            ],
            out_specs=pl.BlockSpec((1, th, W, ctot), lambda n, i: (n, i, 0, 0)),
        ),
        compiler_params=pltpu.CompilerParams(
            dimension_semantics=("parallel", "parallel"),
            vmem_limit_bytes=32 * 1024 * 1024,
        ),
    )(x, x, x, w1, s1, b1, wdw_r, s2_r, b2_r)


def _fold_bn(gamma, beta, mean, var, eps=1e-5):
    scale = gamma / jnp.sqrt(var + eps)
    return scale, beta - mean * scale


def ghost_module_forward(x_nchw, params, *, oup, kernel_size=1, ratio=2,
                         dw_size=3, stride=1, relu=True, row_tile=None):
    # TODO(synk): only kernel_size=1 primary conv and dw_size=3 cheap op are
    # implemented (the module defaults / GhostNet config); general KxK primary
    # conv needs an im2col kernel, wider dw needs a wider row halo.
    assert kernel_size == 1
    assert dw_size == 3

    init_channels = math.ceil(oup / ratio)
    new_channels = init_channels * (ratio - 1)
    r1 = ratio - 1
    K = dw_size

    # NCHW -> NHWC at the module boundary only (hoist in a full NHWC network).
    x = jnp.transpose(x_nchw, (0, 2, 3, 1))
    if stride > 1:  # 1x1 conv with stride == spatial subsampling (pad = 0)
        x = x[:, ::stride, ::stride, :]
    N, H, W, Cin = x.shape

    s1, b1 = _fold_bn(params["bn1_gamma"], params["bn1_beta"],
                      params["bn1_mean"], params["bn1_var"])
    s2, b2 = _fold_bn(params["bn2_gamma"], params["bn2_beta"],
                      params["bn2_mean"], params["bn2_var"])

    # Rearrange the (tiny) depthwise params group-major -> (ghost copy j, group g)
    # so the kernel never has to replicate the activation channels.
    wdw_r = jnp.transpose(params["w_dw"].reshape(init_channels, r1, K * K),
                          (1, 2, 0))                       # (r1, K*K, cinit)
    s2_r = s2.reshape(init_channels, r1).T                 # (r1, cinit)
    b2_r = b2.reshape(init_channels, r1).T

    th = row_tile if row_tile is not None else _auto_row_tile(
        H, W, Cin, init_channels, ratio)
    assert H % th == 0, (H, th)

    out = _ghost_fused_call(x, params["w1"], s1.reshape(1, -1), b1.reshape(1, -1),
                            wdw_r, s2_r, b2_r, K=K, ratio=ratio, th=th,
                            init_channels=init_channels,
                            new_channels=new_channels, relu=relu)
    if init_channels + new_channels > oup:
        out = out[..., :oup]
    return jnp.transpose(out, (0, 3, 1, 2))  # NHWC -> NCHW


# ----------------------------------------------------------------------------
# Deterministic parameter init (shapes follow GhostModule.__init__)
# ----------------------------------------------------------------------------
def init_params(key, inp, oup, kernel_size=1, ratio=2, dw_size=3):
    init_channels = math.ceil(oup / ratio)
    new_channels = init_channels * (ratio - 1)
    ks = jax.random.split(key, 10)
    # PyTorch primary conv weight: (init_channels, inp, 1, 1)
    w1_t = jax.random.normal(ks[0], (init_channels, inp, kernel_size, kernel_size),
                             jnp.float32) * 0.2
    w1 = jnp.transpose(w1_t[:, :, 0, 0], (1, 0))           # (Cin, Cinit)
    # PyTorch depthwise weight: (new_channels, 1, dw, dw)
    w_dw_t = jax.random.normal(ks[1], (new_channels, 1, dw_size, dw_size),
                               jnp.float32) * 0.2
    w_dw = w_dw_t[:, 0, :, :]                               # (Cnew, K, K)
    return dict(
        w1=w1, w_dw=w_dw,
        bn1_gamma=jax.random.uniform(ks[2], (init_channels,), minval=0.5, maxval=1.5),
        bn1_beta=jax.random.normal(ks[3], (init_channels,)) * 0.1,
        bn1_mean=jax.random.normal(ks[4], (init_channels,)) * 0.1,
        bn1_var=jax.random.uniform(ks[5], (init_channels,), minval=0.5, maxval=1.5),
        bn2_gamma=jax.random.uniform(ks[6], (new_channels,), minval=0.5, maxval=1.5),
        bn2_beta=jax.random.normal(ks[7], (new_channels,)) * 0.1,
        bn2_mean=jax.random.normal(ks[8], (new_channels,)) * 0.1,
        bn2_var=jax.random.uniform(ks[9], (new_channels,), minval=0.5, maxval=1.5),
    )


# ----------------------------------------------------------------------------
# Pure-JAX reference (lax convs, NCHW) for a sanity check
# ----------------------------------------------------------------------------
def reference_forward(x_nchw, params, *, oup, ratio=2, dw_size=3):
    init_channels = math.ceil(oup / ratio)
    s1, b1 = _fold_bn(params["bn1_gamma"], params["bn1_beta"],
                      params["bn1_mean"], params["bn1_var"])
    w1 = jnp.transpose(params["w1"], (1, 0))[:, :, None, None]     # OIHW
    x1 = jax.lax.conv_general_dilated(
        x_nchw, w1, (1, 1), "VALID", dimension_numbers=("NCHW", "OIHW", "NCHW"))
    x1 = jnp.maximum(x1 * s1[None, :, None, None] + b1[None, :, None, None], 0.0)

    s2, b2 = _fold_bn(params["bn2_gamma"], params["bn2_beta"],
                      params["bn2_mean"], params["bn2_var"])
    w_dw = params["w_dw"][:, None, :, :]                           # (Cnew,1,K,K)
    x2 = jax.lax.conv_general_dilated(
        x1, w_dw, (1, 1), "SAME", dimension_numbers=("NCHW", "OIHW", "NCHW"),
        feature_group_count=init_channels)
    x2 = jnp.maximum(x2 * s2[None, :, None, None] + b2[None, :, None, None], 0.0)
    return jnp.concatenate([x1, x2], axis=1)[:, :oup, :, :]


if __name__ == "__main__":
    INP, OUP = 4, 8
    N, H, W = 2, 16, 16

    key = jax.random.PRNGKey(0)
    kx, kp = jax.random.split(key)
    x = jax.random.normal(kx, (N, INP, H, W), jnp.float32)   # PyTorch NCHW input
    params = init_params(kp, INP, OUP)

    ref = jax.block_until_ready(reference_forward(x, params, oup=OUP))

    # multi row-tile path (grid = (N, 4)) exercises halo exchange + edge masks
    out = jax.block_until_ready(
        ghost_module_forward(x, params, oup=OUP, row_tile=4))
    assert out.shape == (N, OUP, H, W), out.shape
    np.testing.assert_allclose(np.asarray(out), np.asarray(ref),
                               rtol=1e-2, atol=1e-2)

    # auto row-tile path (single row tile per image)
    out2 = jax.block_until_ready(ghost_module_forward(x, params, oup=OUP))
    np.testing.assert_allclose(np.asarray(out2), np.asarray(ref),
                               rtol=1e-2, atol=1e-2)

    print("KERNEL_OK")
</pallas_src>

<mosaic_0001>
module attributes {stable_mosaic.version = 11 : i64} {
  func.func @_ghost_fused_kernel(%arg0: i32, %arg1: i32, %arg2: memref<1x4x16x4xf32, #tpu.memory_space<vmem>>, %arg3: memref<1x1x16x4xf32, #tpu.memory_space<vmem>>, %arg4: memref<1x1x16x4xf32, #tpu.memory_space<vmem>>, %arg5: memref<4x4xf32, #tpu.memory_space<vmem>>, %arg6: memref<1x4xf32, #tpu.memory_space<vmem>>, %arg7: memref<1x4xf32, #tpu.memory_space<vmem>>, %arg8: memref<1x9x4xf32, #tpu.memory_space<vmem>>, %arg9: memref<1x4xf32, #tpu.memory_space<vmem>>, %arg10: memref<1x4xf32, #tpu.memory_space<vmem>>, %arg11: memref<1x4x16x8xf32, #tpu.memory_space<vmem>>) attributes {dimension_semantics = [#tpu.dimension_semantics<parallel>, #tpu.dimension_semantics<parallel>], iteration_bounds = array<i64: 2, 4>, scalar_prefetch = 0 : i64, scratch_operands = 0 : i64, tpu.core_type = #tpu.core_type<tc>, window_params = [{transform_indices = @transform_0, window_bounds = array<i64: 1, 4, 16, 4>}, {transform_indices = @transform_1, window_bounds = array<i64: 1, 1, 16, 4>}, {transform_indices = @transform_2, window_bounds = array<i64: 1, 1, 16, 4>}, {pipeline_mode = #tpu.pipeline_mode<synchronous>, transform_indices = @transform_3, window_bounds = array<i64: 4, 4>}, {pipeline_mode = #tpu.pipeline_mode<synchronous>, transform_indices = @transform_4, window_bounds = array<i64: 1, 4>}, {pipeline_mode = #tpu.pipeline_mode<synchronous>, transform_indices = @transform_5, window_bounds = array<i64: 1, 4>}, {pipeline_mode = #tpu.pipeline_mode<synchronous>, transform_indices = @transform_6, window_bounds = array<i64: 1, 9, 4>}, {pipeline_mode = #tpu.pipeline_mode<synchronous>, transform_indices = @transform_7, window_bounds = array<i64: 1, 4>}, {pipeline_mode = #tpu.pipeline_mode<synchronous>, transform_indices = @transform_8, window_bounds = array<i64: 1, 4>}, {transform_indices = @transform_9, window_bounds = array<i64: 1, 4, 16, 8>}]} {
    %c0 = arith.constant 0 : index
    %c0_0 = arith.constant 0 : index
    %0 = vector.load %arg5[%c0, %c0_0] : memref<4x4xf32, #tpu.memory_space<vmem>>, vector<4x4xf32>
    %c0_1 = arith.constant 0 : index
    %c0_2 = arith.constant 0 : index
    %1 = vector.load %arg6[%c0_1, %c0_2] : memref<1x4xf32, #tpu.memory_space<vmem>>, vector<1x4xf32>
    %c0_3 = arith.constant 0 : index
    %c0_4 = arith.constant 0 : index
    %2 = vector.load %arg7[%c0_3, %c0_4] : memref<1x4xf32, #tpu.memory_space<vmem>>, vector<1x4xf32>
    %c0_5 = arith.constant 0 : index
    %c0_6 = arith.constant 0 : index
    %c0_7 = arith.constant 0 : index
    %c0_8 = arith.constant 0 : index
    %3 = vector.load %arg2[%c0_5, %c0_6, %c0_7, %c0_8] : memref<1x4x16x4xf32, #tpu.memory_space<vmem>>, vector<1x4x16x4xf32>
    %4 = vector.shape_cast %3 : vector<1x4x16x4xf32> to vector<4x16x4xf32>
    %5 = vector.shape_cast %4 : vector<4x16x4xf32> to vector<64x4xf32>
    %cst = arith.constant dense<0.000000e+00> : vector<64x4xf32>
    %6 = tpu.matmul %5, %0, %cst {dimension_numbers = #tpu.dot_dimension_numbers<[1], [0], [0], [1], [0, 0, 1, 1], [], []>} : vector<64x4xf32>, vector<4x4xf32>, vector<64x4xf32> -> vector<64x4xf32>
    %7 = vector.broadcast %1 : vector<1x4xf32> to vector<64x4xf32>
    %8 = arith.mulf %6, %7 : vector<64x4xf32>
    %9 = vector.broadcast %2 : vector<1x4xf32> to vector<64x4xf32>
    %10 = arith.addf %8, %9 : vector<64x4xf32>
    %cst_9 = arith.constant 0.000000e+00 : f32
    %11 = vector.broadcast %cst_9 : f32 to vector<64x4xf32>
    %12 = arith.maximumf %10, %11 : vector<64x4xf32>
    %13 = vector.shape_cast %12 : vector<64x4xf32> to vector<4x16x4xf32>
    %c0_10 = arith.constant 0 : index
    %c0_11 = arith.constant 0 : index
    %c0_12 = arith.constant 0 : index
    %c0_13 = arith.constant 0 : index
    %14 = vector.load %arg3[%c0_10, %c0_11, %c0_12, %c0_13] : memref<1x1x16x4xf32, #tpu.memory_space<vmem>>, vector<1x1x16x4xf32>
    %15 = vector.shape_cast %14 : vector<1x1x16x4xf32> to vector<16x4xf32>
    %cst_14 = arith.constant dense<0.000000e+00> : vector<16x4xf32>
    %16 = tpu.matmul %15, %0, %cst_14 {dimension_numbers = #tpu.dot_dimension_numbers<[1], [0], [0], [1], [0, 0, 1, 1], [], []>} : vector<16x4xf32>, vector<4x4xf32>, vector<16x4xf32> -> vector<16x4xf32>
    %17 = vector.broadcast %1 : vector<1x4xf32> to vector<16x4xf32>
    %18 = arith.mulf %16, %17 : vector<16x4xf32>
    %19 = vector.broadcast %2 : vector<1x4xf32> to vector<16x4xf32>
    %20 = arith.addf %18, %19 : vector<16x4xf32>
    %cst_15 = arith.constant 0.000000e+00 : f32
    %21 = vector.broadcast %cst_15 : f32 to vector<16x4xf32>
    %22 = arith.maximumf %20, %21 : vector<16x4xf32>
    %c0_16 = arith.constant 0 : index
    %c0_17 = arith.constant 0 : index
    %c0_18 = arith.constant 0 : index
    %c0_19 = arith.constant 0 : index
    %23 = vector.load %arg4[%c0_16, %c0_17, %c0_18, %c0_19] : memref<1x1x16x4xf32, #tpu.memory_space<vmem>>, vector<1x1x16x4xf32>
    %24 = vector.shape_cast %23 : vector<1x1x16x4xf32> to vector<16x4xf32>
    %cst_20 = arith.constant dense<0.000000e+00> : vector<16x4xf32>
    %25 = tpu.matmul %24, %0, %cst_20 {dimension_numbers = #tpu.dot_dimension_numbers<[1], [0], [0], [1], [0, 0, 1, 1], [], []>} : vector<16x4xf32>, vector<4x4xf32>, vector<16x4xf32> -> vector<16x4xf32>
    %26 = vector.broadcast %1 : vector<1x4xf32> to vector<16x4xf32>
    %27 = arith.mulf %25, %26 : vector<16x4xf32>
    %28 = vector.broadcast %2 : vector<1x4xf32> to vector<16x4xf32>
    %29 = arith.addf %27, %28 : vector<16x4xf32>
    %cst_21 = arith.constant 0.000000e+00 : f32
    %30 = vector.broadcast %cst_21 : f32 to vector<16x4xf32>
    %31 = arith.maximumf %29, %30 : vector<16x4xf32>
    %c0_i32 = arith.constant 0 : i32
    %32 = arith.cmpi sgt, %arg1, %c0_i32 : i32
    %cst_22 = arith.constant 0.000000e+00 : f32
    %33 = vector.broadcast %cst_22 : f32 to vector<16x4xf32>
    %34 = arith.select %32, %22, %33 : vector<16x4xf32>
    %c3_i32 = arith.constant 3 : i32
    %35 = arith.cmpi slt, %arg1, %c3_i32 : i32
    %cst_23 = arith.constant 0.000000e+00 : f32
    %36 = vector.broadcast %cst_23 : f32 to vector<16x4xf32>
    %37 = arith.select %35, %31, %36 : vector<16x4xf32>
    %38 = vector.shape_cast %34 : vector<16x4xf32> to vector<1x16x4xf32>
    %39 = vector.shape_cast %37 : vector<16x4xf32> to vector<1x16x4xf32>
    %40 = tpu.concatenate %38, %13, %39 in 0 : vector<1x16x4xf32>, vector<4x16x4xf32>, vector<1x16x4xf32> -> vector<6x16x4xf32>
    %cst_24 = arith.constant 0.000000e+00 : f32
    %41 = vector.broadcast %cst_24 : f32 to vector<6x1x4xf32>
    %42 = vector.extract_strided_slice %40 {offsets = [0, 0, 0], sizes = [6, 15, 4], strides = [1, 1, 1]} : vector<6x16x4xf32> to vector<6x15x4xf32>
    %43 = tpu.concatenate %41, %42 in 1 : vector<6x1x4xf32>, vector<6x15x4xf32> -> vector<6x16x4xf32>
    %44 = vector.extract_strided_slice %40 {offsets = [0, 1, 0], sizes = [6, 15, 4], strides = [1, 1, 1]} : vector<6x16x4xf32> to vector<6x15x4xf32>
    %45 = tpu.concatenate %44, %41 in 1 : vector<6x15x4xf32>, vector<6x1x4xf32> -> vector<6x16x4xf32>
    %c0_25 = arith.constant 0 : index
    %c0_26 = arith.constant 0 : index
    %c0_27 = arith.constant 0 : index
    %46 = vector.load %arg8[%c0_25, %c0_26, %c0_27] : memref<1x9x4xf32, #tpu.memory_space<vmem>>, vector<1x9x4xf32>
    %c0_28 = arith.constant 0 : index
    %c0_29 = arith.constant 0 : index
    %47 = vector.load %arg9[%c0_28, %c0_29] : memref<1x4xf32, #tpu.memory_space<vmem>>, vector<1x4xf32>
    %c0_30 = arith.constant 0 : index
    %c0_31 = arith.constant 0 : index
    %48 = vector.load %arg10[%c0_30, %c0_31] : memref<1x4xf32, #tpu.memory_space<vmem>>, vector<1x4xf32>
    %c0_32 = arith.constant 0 : index
    %c0_33 = arith.constant 0 : index
    %c0_34 = arith.constant 0 : index
    %c0_35 = arith.constant 0 : index
    %49 = vector.load %arg11[%c0_32, %c0_33, %c0_34, %c0_35] : memref<1x4x16x8xf32, #tpu.memory_space<vmem>>, vector<1x4x16x4xf32>
    %50 = vector.shape_cast %49 : vector<1x4x16x4xf32> to vector<4x16x4xf32>
    %51 = vector.shape_cast %13 : vector<4x16x4xf32> to vector<1x4x16x4xf32>
    tpu.vector_store %arg11[%c0_32, %c0_33, %c0_34, %c0_35], %51 {strides = array<i32>} : memref<1x4x16x8xf32, #tpu.memory_space<vmem>>, vector<1x4x16x4xf32>,
    %cst_36 = arith.constant 0.000000e+00 : f32
    %52 = vector.broadcast %cst_36 : f32 to vector<4x16x4xf32>
    %53 = vector.extract_strided_slice %43 {offsets = [0, 0, 0], sizes = [4, 16, 4], strides = [1, 1, 1]} : vector<6x16x4xf32> to vector<4x16x4xf32>
    %54 = vector.extract_strided_slice %46 {offsets = [0, 0, 0], sizes = [1, 1, 4], strides = [1, 1, 1]} : vector<1x9x4xf32> to vector<1x1x4xf32>
    %55 = vector.shape_cast %54 : vector<1x1x4xf32> to vector<4xf32>
    %56 = vector.shape_cast %55 : vector<4xf32> to vector<1x1x4xf32>
    %57 = vector.broadcast %56 : vector<1x1x4xf32> to vector<4x16x4xf32>
    %58 = arith.mulf %53, %57 : vector<4x16x4xf32>
    %59 = arith.addf %52, %58 : vector<4x16x4xf32>
    %60 = vector.extract_strided_slice %40 {offsets = [0, 0, 0], sizes = [4, 16, 4], strides = [1, 1, 1]} : vector<6x16x4xf32> to vector<4x16x4xf32>
    %61 = vector.extract_strided_slice %46 {offsets = [0, 1, 0], sizes = [1, 1, 4], strides = [1, 1, 1]} : vector<1x9x4xf32> to vector<1x1x4xf32>
    %62 = vector.shape_cast %61 : vector<1x1x4xf32> to vector<4xf32>
    %63 = vector.shape_cast %62 : vector<4xf32> to vector<1x1x4xf32>
    %64 = vector.broadcast %63 : vector<1x1x4xf32> to vector<4x16x4xf32>
    %65 = arith.mulf %60, %64 : vector<4x16x4xf32>
    %66 = arith.addf %59, %65 : vector<4x16x4xf32>
    %67 = vector.extract_strided_slice %45 {offsets = [0, 0, 0], sizes = [4, 16, 4], strides = [1, 1, 1]} : vector<6x16x4xf32> to vector<4x16x4xf32>
    %68 = vector.extract_strided_slice %46 {offsets = [0, 2, 0], sizes = [1, 1, 4], strides = [1, 1, 1]} : vector<1x9x4xf32> to vector<1x1x4xf32>
    %69 = vector.shape_cast %68 : vector<1x1x4xf32> to vector<4xf32>
    %70 = vector.shape_cast %69 : vector<4xf32> to vector<1x1x4xf32>
    %71 = vector.broadcast %70 : vector<1x1x4xf32> to vector<4x16x4xf32>
    %72 = arith.mulf %67, %71 : vector<4x16x4xf32>
    %73 = arith.addf %66, %72 : vector<4x16x4xf32>
    %74 = vector.extract_strided_slice %43 {offsets = [1, 0, 0], sizes = [4, 16, 4], strides = [1, 1, 1]} : vector<6x16x4xf32> to vector<4x16x4xf32>
    %75 = vector.extract_strided_slice %46 {offsets = [0, 3, 0], sizes = [1, 1, 4], strides = [1, 1, 1]} : vector<1x9x4xf32> to vector<1x1x4xf32>
    %76 = vector.shape_cast %75 : vector<1x1x4xf32> to vector<4xf32>
    %77 = vector.shape_cast %76 : vector<4xf32> to vector<1x1x4xf32>
    %78 = vector.broadcast %77 : vector<1x1x4xf32> to vector<4x16x4xf32>
    %79 = arith.mulf %74, %78 : vector<4x16x4xf32>
    %80 = arith.addf %73, %79 : vector<4x16x4xf32>
    %81 = vector.extract_strided_slice %40 {offsets = [1, 0, 0], sizes = [4, 16, 4], strides = [1, 1, 1]} : vector<6x16x4xf32> to vector<4x16x4xf32>
    %82 = vector.extract_strided_slice %46 {offsets = [0, 4, 0], sizes = [1, 1, 4], strides = [1, 1, 1]} : vector<1x9x4xf32> to vector<1x1x4xf32>
    %83 = vector.shape_cast %82 : vector<1x1x4xf32> to vector<4xf32>
    %84 = vector.shape_cast %83 : vector<4xf32> to vector<1x1x4xf32>
    %85 = vector.broadcast %84 : vector<1x1x4xf32> to vector<4x16x4xf32>
    %86 = arith.mulf %81, %85 : vector<4x16x4xf32>
    %87 = arith.addf %80, %86 : vector<4x16x4xf32>
    %88 = vector.extract_strided_slice %45 {offsets = [1, 0, 0], sizes = [4, 16, 4], strides = [1, 1, 1]} : vector<6x16x4xf32> to vector<4x16x4xf32>
    %89 = vector.extract_strided_slice %46 {offsets = [0, 5, 0], sizes = [1, 1, 4], strides = [1, 1, 1]} : vector<1x9x4xf32> to vector<1x1x4xf32>
    %90 = vector.shape_cast %89 : vector<1x1x4xf32> to vector<4xf32>
    %91 = vector.shape_cast %90 : vector<4xf32> to vector<1x1x4xf32>
    %92 = vector.broadcast %91 : vector<1x1x4xf32> to vector<4x16x4xf32>
    %93 = arith.mulf %88, %92 : vector<4x16x4xf32>
    %94 = arith.addf %87, %93 : vector<4x16x4xf32>
    %95 = vector.extract_strided_slice %43 {offsets = [2, 0, 0], sizes = [4, 16, 4], strides = [1, 1, 1]} : vector<6x16x4xf32> to vector<4x16x4xf32>
    %96 = vector.extract_strided_slice %46 {offsets = [0, 6, 0], sizes = [1, 1, 4], strides = [1, 1, 1]} : vector<1x9x4xf32> to vector<1x1x4xf32>
    %97 = vector.shape_cast %96 : vector<1x1x4xf32> to vector<4xf32>
    %98 = vector.shape_cast %97 : vector<4xf32> to vector<1x1x4xf32>
    %99 = vector.broadcast %98 : vector<1x1x4xf32> to vector<4x16x4xf32>
    %100 = arith.mulf %95, %99 : vector<4x16x4xf32>
    %101 = arith.addf %94, %100 : vector<4x16x4xf32>
    %102 = vector.extract_strided_slice %40 {offsets = [2, 0, 0], sizes = [4, 16, 4], strides = [1, 1, 1]} : vector<6x16x4xf32> to vector<4x16x4xf32>
    %103 = vector.extract_strided_slice %46 {offsets = [0, 7, 0], sizes = [1, 1, 4], strides = [1, 1, 1]} : vector<1x9x4xf32> to vector<1x1x4xf32>
    %104 = vector.shape_cast %103 : vector<1x1x4xf32> to vector<4xf32>
    %105 = vector.shape_cast %104 : vector<4xf32> to vector<1x1x4xf32>
    %106 = vector.broadcast %105 : vector<1x1x4xf32> to vector<4x16x4xf32>
    %107 = arith.mulf %102, %106 : vector<4x16x4xf32>
    %108 = arith.addf %101, %107 : vector<4x16x4xf32>
    %109 = vector.extract_strided_slice %45 {offsets = [2, 0, 0], sizes = [4, 16, 4], strides = [1, 1, 1]} : vector<6x16x4xf32> to vector<4x16x4xf32>
    %110 = vector.extract_strided_slice %46 {offsets = [0, 8, 0], sizes = [1, 1, 4], strides = [1, 1, 1]} : vector<1x9x4xf32> to vector<1x1x4xf32>
    %111 = vector.shape_cast %110 : vector<1x1x4xf32> to vector<4xf32>
    %112 = vector.shape_cast %111 : vector<4xf32> to vector<1x1x4xf32>
    %113 = vector.broadcast %112 : vector<1x1x4xf32> to vector<4x16x4xf32>
    %114 = arith.mulf %109, %113 : vector<4x16x4xf32>
    %115 = arith.addf %108, %114 : vector<4x16x4xf32>
    %116 = vector.shape_cast %47 : vector<1x4xf32> to vector<4xf32>
    %117 = vector.shape_cast %116 : vector<4xf32> to vector<1x1x4xf32>
    %118 = vector.broadcast %117 : vector<1x1x4xf32> to vector<4x16x4xf32>
    %119 = arith.mulf %115, %118 : vector<4x16x4xf32>
    %120 = vector.shape_cast %48 : vector<1x4xf32> to vector<4xf32>
    %121 = vector.shape_cast %120 : vector<4xf32> to vector<1x1x4xf32>
    %122 = vector.broadcast %121 : vector<1x1x4xf32> to vector<4x16x4xf32>
    %123 = arith.addf %119, %122 : vector<4x16x4xf32>
    %cst_37 = arith.constant 0.000000e+00 : f32
    %124 = vector.broadcast %cst_37 : f32 to vector<4x16x4xf32>
    %125 = arith.maximumf %123, %124 : vector<4x16x4xf32>
    %c0_38 = arith.constant 0 : index
    %c0_39 = arith.constant 0 : index
    %c0_40 = arith.constant 0 : index
    %c4 = arith.constant 4 : index
    %126 = vector.load %arg11[%c0_38, %c0_39, %c0_40, %c4] : memref<1x4x16x8xf32, #tpu.memory_space<vmem>>, vector<1x4x16x4xf32>
    %127 = vector.shape_cast %126 : vector<1x4x16x4xf32> to vector<4x16x4xf32>
    %128 = vector.shape_cast %125 : vector<4x16x4xf32> to vector<1x4x16x4xf32>
    tpu.vector_store %arg11[%c0_38, %c0_39, %c0_40, %c4], %128 {strides = array<i32>} : memref<1x4x16x8xf32, #tpu.memory_space<vmem>>, vector<1x4x16x4xf32>,
    return
  }
  func.func @transform_0(%arg0: i32, %arg1: i32) -> (i32, i32, i32, i32) {
    %c0_i32 = arith.constant 0 : i32
    %c0_i32_0 = arith.constant 0 : i32
    %c0_i32_1 = arith.constant 0 : i32
    return %arg0, %arg1, %c0_i32, %c0_i32_0 : i32, i32, i32, i32
  }
  func.func @transform_1(%arg0: i32, %arg1: i32) -> (i32, i32, i32, i32) {
    %c4_i32 = arith.constant 4 : i32
    %0 = arith.muli %arg1, %c4_i32 : i32
    %c1_i32 = arith.constant 1 : i32
    %1 = arith.subi %0, %c1_i32 : i32
    %c0_i32 = arith.constant 0 : i32
    %2 = arith.maxsi %1, %c0_i32 : i32
    %c0_i32_0 = arith.constant 0 : i32
    %c0_i32_1 = arith.constant 0 : i32
    %c0_i32_2 = arith.constant 0 : i32
    return %arg0, %2, %c0_i32_0, %c0_i32_1 : i32, i32, i32, i32
  }
  func.func @transform_2(%arg0: i32, %arg1: i32) -> (i32, i32, i32, i32) {
    %c1_i32 = arith.constant 1 : i32
    %0 = arith.addi %arg1, %c1_i32 : i32
    %c4_i32 = arith.constant 4 : i32
    %1 = arith.muli %0, %c4_i32 : i32
    %c15_i32 = arith.constant 15 : i32
    %2 = arith.minsi %1, %c15_i32 : i32
    %c0_i32 = arith.constant 0 : i32
    %c0_i32_0 = arith.constant 0 : i32
    %c0_i32_1 = arith.constant 0 : i32
    return %arg0, %2, %c0_i32, %c0_i32_0 : i32, i32, i32, i32
  }
  func.func @transform_3(%arg0: i32, %arg1: i32) -> (i32, i32) {
    %c0_i32 = arith.constant 0 : i32
    %c0_i32_0 = arith.constant 0 : i32
    %c0_i32_1 = arith.constant 0 : i32
    return %c0_i32, %c0_i32_0 : i32, i32
  }
  func.func @transform_4(%arg0: i32, %arg1: i32) -> (i32, i32) {
    %c0_i32 = arith.constant 0 : i32
    %c0_i32_0 = arith.constant 0 : i32
    %c0_i32_1 = arith.constant 0 : i32
    return %c0_i32, %c0_i32_0 : i32, i32
  }
  func.func @transform_5(%arg0: i32, %arg1: i32) -> (i32, i32) {
    %c0_i32 = arith.constant 0 : i32
    %c0_i32_0 = arith.constant 0 : i32
    %c0_i32_1 = arith.constant 0 : i32
    return %c0_i32, %c0_i32_0 : i32, i32
  }
  func.func @transform_6(%arg0: i32, %arg1: i32) -> (i32, i32, i32) {
    %c0_i32 = arith.constant 0 : i32
    %c0_i32_0 = arith.constant 0 : i32
    %c0_i32_1 = arith.constant 0 : i32
    %c0_i32_2 = arith.constant 0 : i32
    return %c0_i32, %c0_i32_0, %c0_i32_1 : i32, i32, i32
  }
  func.func @transform_7(%arg0: i32, %arg1: i32) -> (i32, i32) {
    %c0_i32 = arith.constant 0 : i32
    %c0_i32_0 = arith.constant 0 : i32
    %c0_i32_1 = arith.constant 0 : i32
    return %c0_i32, %c0_i32_0 : i32, i32
  }
  func.func @transform_8(%arg0: i32, %arg1: i32) -> (i32, i32) {
    %c0_i32 = arith.constant 0 : i32
    %c0_i32_0 = arith.constant 0 : i32
    %c0_i32_1 = arith.constant 0 : i32
    return %c0_i32, %c0_i32_0 : i32, i32
  }
  func.func @transform_9(%arg0: i32, %arg1: i32) -> (i32, i32, i32, i32) {
    %c0_i32 = arith.constant 0 : i32
    %c0_i32_0 = arith.constant 0 : i32
    %c0_i32_1 = arith.constant 0 : i32
    return %arg0, %arg1, %c0_i32, %c0_i32_0 : i32, i32, i32, i32
  }
}

</mosaic_0001>

<llo_original>
// kernel: tpu_custom_call.1
$region0: #{tpu_custom_call.1}
  #allocation0 [shape = 'u32[]', space=smem, size = 0x4, offset = 0x4, fixed_abs, tag = 'smem constant byte address 0x4 - core index']
  #allocation1 [shape = 'u32[72,128]{1,0:T(1,128)}', space=vmem, size = 0x9000, scoped, tag = 'internal scratch']
  %s0 = inlined_call_operand.vmem [shape: f32[2,16,16,4], index: 0, kind: input, shape index: {}]
  %s1 = inlined_call_operand.vmem [shape: f32[2,16,16,4], index: 1, kind: input, shape index: {}]
  %s2 = inlined_call_operand.vmem [shape: f32[2,16,16,4], index: 2, kind: input, shape index: {}]
  %s3 = inlined_call_operand.vmem [shape: f32[4,4], index: 3, kind: input, shape index: {}]
  %s4 = inlined_call_operand.vmem [shape: f32[1,4], index: 4, kind: input, shape index: {}]
  %s5 = inlined_call_operand.vmem [shape: f32[1,4], index: 5, kind: input, shape index: {}]
  %s6 = inlined_call_operand.vmem [shape: f32[1,9,4], index: 6, kind: input, shape index: {}]
  %s7 = inlined_call_operand.vmem [shape: f32[1,4], index: 7, kind: input, shape index: {}]
  %s8 = inlined_call_operand.vmem [shape: f32[1,4], index: 8, kind: input, shape index: {}]
  %s9 = inlined_call_operand.vmem [shape: f32[2,16,16,8], index: 9, kind: output, shape index: {}]
  %s10 = sld [smem:[#allocation0]]
  $region69: #{tpu_custom_call.1} parent=0
    _
  %s12 = ssub.s32 1, %s10
  %s13 = scalar_select 0, %s12, %s10
  loop: start=0, step=1, limit=10
  $region2: #{tpu_custom_call.1} parent=0 // loop_pre_header
    _
  $region3: #{tpu_custom_call.1} parent=0 // loop_header
    %s15 = sphi 0, %s19
    %p16 = scmp.ge.s32.totalorder %s15, 10
    %s22 = sphi 0, %s34
    %s23 = sphi 0, %s30
    %s24 = sphi 0, %s22
    %s25 = sphi 0, %s23
    %s26 = sphi 0, %s24
    %s27 = sphi 0, %s25
    %s39 = sphi 0, %s41
    %s42 = sphi 0, %s39
    %s43 = sphi 0, %s42
    %s59 = sphi 0, %s43
    %s75 = sphi 0, %s77
    %s78 = sphi 0, %s75
    %s79 = sphi 0, %s78
    %s95 = sphi 0, %s79
    %s111 = sphi 0, %s113
    %s114 = sphi 0, %s111
    %s115 = sphi 0, %s114
    %s131 = sphi 0, %s115
    %s135 = sphi 0, %s135
    %s137 = sphi 0, %s135
    %s138 = sphi 0, %s137
    %s152 = sphi 0, %s138
    %s156 = sphi 0, %s156
    %s158 = sphi 0, %s156
    %s159 = sphi 0, %s158
    %s173 = sphi 0, %s159
    %s177 = sphi 0, %s177
    %s179 = sphi 0, %s177
    %s180 = sphi 0, %s179
    %s194 = sphi 0, %s180
    %s198 = sphi 0, %s198
    %s200 = sphi 0, %s198
    %s201 = sphi 0, %s200
    %s215 = sphi 0, %s201
    %s219 = sphi 0, %s219
    %s221 = sphi 0, %s219
    %s222 = sphi 0, %s221
    %s236 = sphi 0, %s222
    %s240 = sphi 0, %s240
    %s242 = sphi 0, %s240
    %s243 = sphi 0, %s242
    %s257 = sphi 0, %s243
    %s265 = sphi 0, %s267
    %s268 = sphi 0, %s265
    %s269 = sphi 0, %s268
    %s285 = sphi 0, %s269
  $region4: #{tpu_custom_call.1} parent=0 // loop_header_branch
    %18 = sbr.rel (%p16) target = $region8
  $region5: #{tpu_custom_call.1} parent=0 // loop_body
    %s20 = ssub.s32 %s15, 1
    %s21 = ssub.s32 %s15, 2
    %s28 = sadd.s32 1, %s23
    %p29 = scmp.ge.s32.totalorder %s28, 4
    %s30 = scalar_select %p29, 0, %s28
    %s31 = sadd.s32 1, %s22
    %s32 = scalar_select %p29, %s31, %s22
    %p33 = scmp.ge.s32.totalorder %s32, 2
    %s34 = scalar_select %p33, 0, %s32
    %s35 = ssub.s32 %s22, %s34
    %s36 = ssub.s32 %s23, %s30
    %s37 = sor.u32 %s35, %s36
    %p38 = scmp.eq.s32.totalorder %s37, 0
    %s40 = sadd.s32 %s39, 1
    %s41 = scalar_select %p38, %s39, %s40
    %p44 = pneg %p38
    %p45 = scmp.eq.s32.totalorder %s15, 7
    %p46 = por %p44, %p45
    %p47 = scmp.ne.s32.totalorder %s39, %s42
    %p48 = scmp.eq.s32.totalorder %s15, 0
    %p49 = por %p47, %p48
    %p50 = scmp.ne.s32.totalorder %s39, %s42
    %p51 = scmp.eq.s32.totalorder %s20, 7
    %p52 = por %p50, %p51
    %p53 = scmp.ne.s32.totalorder %s42, %s43
    %p54 = scmp.eq.s32.totalorder %s20, 0
    %p55 = por %p53, %p54
    %p56 = scmp.ne.s32.totalorder %s42, %s43
    %p57 = scmp.eq.s32.totalorder %s21, 7
    %p58 = por %p56, %p57
    %p60 = scmp.ne.s32.totalorder %s43, %s59
    %p61 = scmp.eq.s32.totalorder %s21, 0
    %p62 = por %p60, %p61
    %s63 = smul.u32 %s23, 4
    %s64 = ssub.s32 %s63, 1
    %p65 = scmp.gt.s32.totalorder %s64, 0
    %s66 = scalar_select %p65, %s64, 0
    %s67 = smul.u32 %s30, 4
    %s68 = ssub.s32 %s67, 1
    %p69 = scmp.gt.s32.totalorder %s68, 0
    %s70 = scalar_select %p69, %s68, 0
    %s71 = ssub.s32 %s22, %s34
    %s72 = ssub.s32 %s66, %s70
    %s73 = sor.u32 %s71, %s72
    %p74 = scmp.eq.s32.totalorder %s73, 0
    %s76 = sadd.s32 %s75, 1
    %s77 = scalar_select %p74, %s75, %s76
    %p80 = pneg %p74
    %p81 = scmp.eq.s32.totalorder %s15, 7
    %p82 = por %p80, %p81
    %p83 = scmp.ne.s32.totalorder %s75, %s78
    %p84 = scmp.eq.s32.totalorder %s15, 0
    %p85 = por %p83, %p84
    %p86 = scmp.ne.s32.totalorder %s75, %s78
    %p87 = scmp.eq.s32.totalorder %s20, 7
    %p88 = por %p86, %p87
    %p89 = scmp.ne.s32.totalorder %s78, %s79
    %p90 = scmp.eq.s32.totalorder %s20, 0
    %p91 = por %p89, %p90
    %p92 = scmp.ne.s32.totalorder %s78, %s79
    %p93 = scmp.eq.s32.totalorder %s21, 7
    %p94 = por %p92, %p93
    %p96 = scmp.ne.s32.totalorder %s79, %s95
    %p97 = scmp.eq.s32.totalorder %s21, 0
    %p98 = por %p96, %p97
    %s99 = sadd.s32 %s23, 1
    %s100 = smul.u32 %s99, 4
    %p101 = scmp.lt.s32.totalorder %s100, 15
    %s102 = scalar_select %p101, %s100, 15
    %s103 = sadd.s32 %s30, 1
    %s104 = smul.u32 %s103, 4
    %p105 = scmp.lt.s32.totalorder %s104, 15
    %s106 = scalar_select %p105, %s104, 15
    %s107 = ssub.s32 %s22, %s34
    %s108 = ssub.s32 %s102, %s106
    %s109 = sor.u32 %s107, %s108
    %p110 = scmp.eq.s32.totalorder %s109, 0
    %s112 = sadd.s32 %s111, 1
    %s113 = scalar_select %p110, %s111, %s112
    %p116 = pneg %p110
    %p117 = scmp.eq.s32.totalorder %s15, 7
    %p118 = por %p116, %p117
    %p119 = scmp.ne.s32.totalorder %s111, %s114
    %p120 = scmp.eq.s32.totalorder %s15, 0
    %p121 = por %p119, %p120
    %p122 = scmp.ne.s32.totalorder %s111, %s114
    %p123 = scmp.eq.s32.totalorder %s20, 7
    %p124 = por %p122, %p123
    %p125 = scmp.ne.s32.totalorder %s114, %s115
    %p126 = scmp.eq.s32.totalorder %s20, 0
    %p127 = por %p125, %p126
    %p128 = scmp.ne.s32.totalorder %s114, %s115
    %p129 = scmp.eq.s32.totalorder %s21, 7
    %p130 = por %p128, %p129
    %p132 = scmp.ne.s32.totalorder %s115, %s131
    %p133 = scmp.eq.s32.totalorder %s21, 0
    %p134 = por %p132, %p133
    %s136 = sadd.s32 %s135, 1
    %p139 = scmp.eq.s32.totalorder %s15, 7
    %p140 = scmp.ne.s32.totalorder %s135, %s137
    %p141 = scmp.eq.s32.totalorder %s15, 0
    %p142 = por %p140, %p141
    %p143 = scmp.ne.s32.totalorder %s135, %s137
    %p144 = scmp.eq.s32.totalorder %s20, 7
    %p145 = por %p143, %p144
    %p146 = scmp.ne.s32.totalorder %s137, %s138
    %p147 = scmp.eq.s32.totalorder %s20, 0
    %p148 = por %p146, %p147
    %p149 = scmp.ne.s32.totalorder %s137, %s138
    %p150 = scmp.eq.s32.totalorder %s21, 7
    %p151 = por %p149, %p150
    %p153 = scmp.ne.s32.totalorder %s138, %s152
    %p154 = scmp.eq.s32.totalorder %s21, 0
    %p155 = por %p153, %p154
    %s157 = sadd.s32 %s156, 1
    %p160 = scmp.eq.s32.totalorder %s15, 7
    %p161 = scmp.ne.s32.totalorder %s156, %s158
    %p162 = scmp.eq.s32.totalorder %s15, 0
    %p163 = por %p161, %p162
    %p164 = scmp.ne.s32.totalorder %s156, %s158
    %p165 = scmp.eq.s32.totalorder %s20, 7
    %p166 = por %p164, %p165
    %p167 = scmp.ne.s32.totalorder %s158, %s159
    %p168 = scmp.eq.s32.totalorder %s20, 0
    %p169 = por %p167, %p168
    %p170 = scmp.ne.s32.totalorder %s158, %s159
    %p171 = scmp.eq.s32.totalorder %s21, 7
    %p172 = por %p170, %p171
    %p174 = scmp.ne.s32.totalorder %s159, %s173
    %p175 = scmp.eq.s32.totalorder %s21, 0
    %p176 = por %p174, %p175
    %s178 = sadd.s32 %s177, 1
    %p181 = scmp.eq.s32.totalorder %s15, 7
    %p182 = scmp.ne.s32.totalorder %s177, %s179
    %p183 = scmp.eq.s32.totalorder %s15, 0
    %p184 = por %p182, %p183
    %p185 = scmp.ne.s32.totalorder %s177, %s179
    %p186 = scmp.eq.s32.totalorder %s20, 7
    %p187 = por %p185, %p186
    %p188 = scmp.ne.s32.totalorder %s179, %s180
    %p189 = scmp.eq.s32.totalorder %s20, 0
    %p190 = por %p188, %p189
    %p191 = scmp.ne.s32.totalorder %s179, %s180
    %p192 = scmp.eq.s32.totalorder %s21, 7
    %p193 = por %p191, %p192
    %p195 = scmp.ne.s32.totalorder %s180, %s194
    %p196 = scmp.eq.s32.totalorder %s21, 0
    %p197 = por %p195, %p196
    %s199 = sadd.s32 %s198, 1
    %p202 = scmp.eq.s32.totalorder %s15, 7
    %p203 = scmp.ne.s32.totalorder %s198, %s200
    %p204 = scmp.eq.s32.totalorder %s15, 0
    %p205 = por %p203, %p204
    %p206 = scmp.ne.s32.totalorder %s198, %s200
    %p207 = scmp.eq.s32.totalorder %s20, 7
    %p208 = por %p206, %p207
    %p209 = scmp.ne.s32.totalorder %s200, %s201
    %p210 = scmp.eq.s32.totalorder %s20, 0
    %p211 = por %p209, %p210
    %p212 = scmp.ne.s32.totalorder %s200, %s201
    %p213 = scmp.eq.s32.totalorder %s21, 7
    %p214 = por %p212, %p213
    %p216 = scmp.ne.s32.totalorder %s201, %s215
    %p217 = scmp.eq.s32.totalorder %s21, 0
    %p218 = por %p216, %p217
    %s220 = sadd.s32 %s219, 1
    %p223 = scmp.eq.s32.totalorder %s15, 7
    %p224 = scmp.ne.s32.totalorder %s219, %s221
    %p225 = scmp.eq.s32.totalorder %s15, 0
    %p226 = por %p224, %p225
    %p227 = scmp.ne.s32.totalorder %s219, %s221
    %p228 = scmp.eq.s32.totalorder %s20, 7
    %p229 = por %p227, %p228
    %p230 = scmp.ne.s32.totalorder %s221, %s222
    %p231 = scmp.eq.s32.totalorder %s20, 0
    %p232 = por %p230, %p231
    %p233 = scmp.ne.s32.totalorder %s221, %s222
    %p234 = scmp.eq.s32.totalorder %s21, 7
    %p235 = por %p233, %p234
    %p237 = scmp.ne.s32.totalorder %s222, %s236
    %p238 = scmp.eq.s32.totalorder %s21, 0
    %p239 = por %p237, %p238
    %s241 = sadd.s32 %s240, 1
    %p244 = scmp.eq.s32.totalorder %s15, 7
    %p245 = scmp.ne.s32.totalorder %s240, %s242
    %p246 = scmp.eq.s32.totalorder %s15, 0
    %p247 = por %p245, %p246
    %p248 = scmp.ne.s32.totalorder %s240, %s242
    %p249 = scmp.eq.s32.totalorder %s20, 7
    %p250 = por %p248, %p249
    %p251 = scmp.ne.s32.totalorder %s242, %s243
    %p252 = scmp.eq.s32.totalorder %s20, 0
    %p253 = por %p251, %p252
    %p254 = scmp.ne.s32.totalorder %s242, %s243
    %p255 = scmp.eq.s32.totalorder %s21, 7
    %p256 = por %p254, %p255
    %p258 = scmp.ne.s32.totalorder %s243, %s257
    %p259 = scmp.eq.s32.totalorder %s21, 0
    %p260 = por %p258, %p259
    %s261 = ssub.s32 %s22, %s34
    %s262 = ssub.s32 %s23, %s30
    %s263 = sor.u32 %s261, %s262
    %p264 = scmp.eq.s32.totalorder %s263, 0
    %s266 = sadd.s32 %s265, 1
    %s267 = scalar_select %p264, %s265, %s266
    %p270 = pneg %p264
    %p271 = scmp.eq.s32.totalorder %s15, 7
    %p272 = por %p270, %p271
    %p273 = scmp.ne.s32.totalorder %s265, %s268
    %p274 = scmp.eq.s32.totalorder %s15, 0
    %p275 = por %p273, %p274
    %p276 = scmp.ne.s32.totalorder %s265, %s268
    %p277 = scmp.eq.s32.totalorder %s20, 7
    %p278 = por %p276, %p277
    %p279 = scmp.ne.s32.totalorder %s268, %s269
    %p280 = scmp.eq.s32.totalorder %s20, 0
    %p281 = por %p279, %p280
    %p282 = scmp.ne.s32.totalorder %s268, %s269
    %p283 = scmp.eq.s32.totalorder %s21, 7
    %p284 = por %p282, %p283
    %p286 = scmp.ne.s32.totalorder %s269, %s285
    %p287 = scmp.eq.s32.totalorder %s21, 0
    %p288 = por %p286, %p287
    %p289 = scmp.le.s32.totalorder 1, %s15
    %p290 = scmp.lt.s32.totalorder %s15, 9
    %p291 = pnand %p289, %p290
    %p292 = pneg %p291
    // Predicated region
    $region9: #{tpu_custom_call.1} parent=5 // pred_check
      _
    $region10: #{tpu_custom_call.1} parent=5 // pred_check_branch
      %294 = sbr.rel (%p291) target = $region12
    $region11: #{tpu_custom_call.1} parent=5 // pred_region
      %s295 = ssub.s32 %s15, 1
      // Predicated region
      $region13: #{tpu_custom_call.1} parent=11 // pred_check
        %p296 = pneg %p148
      $region14: #{tpu_custom_call.1} parent=11 // pred_check_branch
        %298 = sbr.rel (%p296) target = $region16
      $region15: #{tpu_custom_call.1} parent=11 // pred_region
        _
      $region16: #{tpu_custom_call.1} parent=11 // pred_fallthru
        _
      // Predicated region
      $region17: #{tpu_custom_call.1} parent=11 // pred_check
        %p299 = pneg %p169
      $region18: #{tpu_custom_call.1} parent=11 // pred_check_branch
        %301 = sbr.rel (%p299) target = $region20
      $region19: #{tpu_custom_call.1} parent=11 // pred_region
        _
      $region20: #{tpu_custom_call.1} parent=11 // pred_fallthru
        _
      // Predicated region
      $region21: #{tpu_custom_call.1} parent=11 // pred_check
        %p302 = pneg %p190
      $region22: #{tpu_custom_call.1} parent=11 // pred_check_branch
        %304 = sbr.rel (%p302) target = $region24
      $region23: #{tpu_custom_call.1} parent=11 // pred_region
        _
      $region24: #{tpu_custom_call.1} parent=11 // pred_fallthru
        _
      // Predicated region
      $region25: #{tpu_custom_call.1} parent=11 // pred_check
        %p305 = pneg %p211
      $region26: #{tpu_custom_call.1} parent=11 // pred_check_branch
        %307 = sbr.rel (%p305) target = $region28
      $region27: #{tpu_custom_call.1} parent=11 // pred_region
        _
      $region28: #{tpu_custom_call.1} parent=11 // pred_fallthru
        _
      // Predicated region
      $region29: #{tpu_custom_call.1} parent=11 // pred_check
        %p308 = pneg %p232
      $region30: #{tpu_custom_call.1} parent=11 // pred_check_branch
        %310 = sbr.rel (%p308) target = $region32
      $region31: #{tpu_custom_call.1} parent=11 // pred_region
        _
      $region32: #{tpu_custom_call.1} parent=11 // pred_fallthru
        _
      // Predicated region
      $region33: #{tpu_custom_call.1} parent=11 // pred_check
        %p311 = pneg %p253
      $region34: #{tpu_custom_call.1} parent=11 // pred_check_branch
        %313 = sbr.rel (%p311) target = $region36
      $region35: #{tpu_custom_call.1} parent=11 // pred_region
        _
      $region36: #{tpu_custom_call.1} parent=11 // pred_fallthru
        _
    $region12: #{tpu_custom_call.1} parent=5 // pred_fallthru
      _
    %p314 = scmp.lt.s32.totalorder %s15, 8
    // Predicated region
    $region37: #{tpu_custom_call.1} parent=5 // pred_check
      %p315 = pneg %p314
    $region38: #{tpu_custom_call.1} parent=5 // pred_check_branch
      %317 = sbr.rel (%p315) target = $region40
    $region39: #{tpu_custom_call.1} parent=5 // pred_region
      // Predicated region
      $region41: #{tpu_custom_call.1} parent=39 // pred_check
        %p318 = pneg %p49
      $region42: #{tpu_custom_call.1} parent=39 // pred_check_branch
        %320 = sbr.rel (%p318) target = $region44
      $region43: #{tpu_custom_call.1} parent=39 // pred_region
        %s321 = smul.u32 4, %s23
        %p322 = scmp.lt.s32.totalorder %s22, 1
        %s323 = scalar_select %p322, %s22, 1
        %p324 = scmp.lt.s32.totalorder %s321, 15
        %s325 = scalar_select %p324, %s321, 15
        %s326 = smul.addr %s325, 2
        %s327 = smul.addr %s323, 32
        %s328 = sadd.s32 %s326, %s327
        %s329 = smul.addr %s328, 8
        %s330 = scalar_lea.vmem %s0, %s329
        %s331 = smul.u32 4, %s23
      $region44: #{tpu_custom_call.1} parent=39 // pred_fallthru
        _
      // Predicated region
      $region45: #{tpu_custom_call.1} parent=39 // pred_check
        %p332 = pneg %p85
      $region46: #{tpu_custom_call.1} parent=39 // pred_check_branch
        %334 = sbr.rel (%p332) target = $region48
      $region47: #{tpu_custom_call.1} parent=39 // pred_region
        %s335 = smul.u32 %s23, 4
        %s336 = ssub.s32 %s335, 1
        %p337 = scmp.gt.s32.totalorder %s336, 0
        %s338 = scalar_select %p337, %s336, 0
        %p339 = scmp.lt.s32.totalorder %s22, 1
        %s340 = scalar_select %p339, %s22, 1
        %p341 = scmp.lt.s32.totalorder %s338, 15
        %s342 = scalar_select %p341, %s338, 15
        %s343 = smul.addr %s342, 2
        %s344 = smul.addr %s340, 32
        %s345 = sadd.s32 %s343, %s344
        %s346 = smul.addr %s345, 8
        %s347 = scalar_lea.vmem %s1, %s346
        %s348 = smul.u32 %s23, 4
        %s349 = ssub.s32 %s348, 1
        %p350 = scmp.gt.s32.totalorder %s349, 0
        %s351 = scalar_select %p350, %s349, 0
      $region48: #{tpu_custom_call.1} parent=39 // pred_fallthru
        _
      // Predicated region
      $region49: #{tpu_custom_call.1} parent=39 // pred_check
        %p352 = pneg %p121
      $region50: #{tpu_custom_call.1} parent=39 // pred_check_branch
        %354 = sbr.rel (%p352) target = $region52
      $region51: #{tpu_custom_call.1} parent=39 // pred_region
        %s355 = sadd.s32 %s23, 1
        %s356 = smul.u32 %s355, 4
        %p357 = scmp.lt.s32.totalorder %s356, 15
        %s358 = scalar_select %p357, %s356, 15
        %p359 = scmp.lt.s32.totalorder %s22, 1
        %s360 = scalar_select %p359, %s22, 1
        %p361 = scmp.lt.s32.totalorder %s358, 15
        %s362 = scalar_select %p361, %s358, 15
        %s363 = smul.addr %s362, 2
        %s364 = smul.addr %s360, 32
        %s365 = sadd.s32 %s363, %s364
        %s366 = smul.addr %s365, 8
        %s367 = scalar_lea.vmem %s2, %s366
        %s368 = sadd.s32 %s23, 1
        %s369 = smul.u32 %s368, 4
        %p370 = scmp.lt.s32.totalorder %s369, 15
        %s371 = scalar_select %p370, %s369, 15
      $region52: #{tpu_custom_call.1} parent=39 // pred_fallthru
        _
    $region40: #{tpu_custom_call.1} parent=5 // pred_fallthru
      _
    %p372 = scmp.le.s32.totalorder 1, %s15
    %p373 = scmp.lt.s32.totalorder %s15, 9
    %p374 = pnand %p372, %p373
    %p375 = pneg %p374
    // Predicated region
    $region53: #{tpu_custom_call.1} parent=5 // pred_check
      _
    $region54: #{tpu_custom_call.1} parent=5 // pred_check_branch
      %377 = sbr.rel (%p374) target = $region56
    $region55: #{tpu_custom_call.1} parent=5 // pred_region
      %s378 = ssub.s32 %s15, 1
      %s379 = smul.u32 4, %s25
      %p380 = scmp.lt.s32.totalorder %s24, 1
      %s381 = scalar_select %p380, %s24, 1
      %p382 = scmp.lt.s32.totalorder %s379, 15
      %s383 = scalar_select %p382, %s379, 15
      %s384 = smul.addr %s383, 2
      %s385 = smul.addr %s381, 32
      %s386 = sadd.s32 %s384, %s385
      %s387 = smul.addr %s386, 8
      %s388 = scalar_lea.vmem %s0, %s387
      %p389 = pneg %p55
      %p390 = pneg %p52
      %s391 = smul.u32 %s25, 4
      %s392 = ssub.s32 %s391, 1
      %p393 = scmp.gt.s32.totalorder %s392, 0
      %s394 = scalar_select %p393, %s392, 0
      %p395 = scmp.lt.s32.totalorder %s24, 1
      %s396 = scalar_select %p395, %s24, 1
      %p397 = scmp.lt.s32.totalorder %s394, 15
      %s398 = scalar_select %p397, %s394, 15
      %s399 = smul.addr %s398, 2
      %s400 = smul.addr %s396, 32
      %s401 = sadd.s32 %s399, %s400
      %s402 = smul.addr %s401, 8
      %s403 = scalar_lea.vmem %s1, %s402
      %p404 = pneg %p91
      %p405 = pneg %p88
      %s406 = sadd.s32 %s25, 1
      %s407 = smul.u32 %s406, 4
      %p408 = scmp.lt.s32.totalorder %s407, 15
      %s409 = scalar_select %p408, %s407, 15
      %p410 = scmp.lt.s32.totalorder %s24, 1
      %s411 = scalar_select %p410, %s24, 1
      %p412 = scmp.lt.s32.totalorder %s409, 15
      %s413 = scalar_select %p412, %s409, 15
      %s414 = smul.addr %s413, 2
      %s415 = smul.addr %s411, 32
      %s416 = sadd.s32 %s414, %s415
      %s417 = smul.addr %s416, 8
      %s418 = scalar_lea.vmem %s2, %s417
      %p419 = pneg %p127
      %p420 = pneg %p124
      %p421 = pneg %p148
      %p422 = pneg %p145
      %p423 = pneg %p169
      %p424 = pneg %p166
      %p425 = pneg %p190
      %p426 = pneg %p187
      %p427 = pneg %p211
      %p428 = pneg %p208
      %p429 = pneg %p232
      %p430 = pneg %p229
      %p431 = pneg %p253
      %p432 = pneg %p250
      %p433 = pneg %p281
      %p434 = pneg %p278
      %s435 = smul.u32 4, %s25
      %p436 = scmp.lt.s32.totalorder %s24, 1
      %s437 = scalar_select %p436, %s24, 1
      %p438 = scmp.lt.s32.totalorder %s435, 15
      %s439 = scalar_select %p438, %s435, 15
      %s440 = smul.addr %s439, 2
      %s441 = smul.addr %s437, 32
      %s442 = sadd.s32 %s440, %s441
      %s443 = smul.addr %s442, 8
      %s444 = scalar_lea.vmem %s9, %s443
      %s445 = smul.u32 4, %s25
      %p446 = scmp.lt.s32.totalorder %s24, 1
      %s447 = scalar_select %p446, %s24, 1
      %p448 = scmp.lt.s32.totalorder %s445, 15
      %s449 = scalar_select %p448, %s445, 15
      %s450 = smul.addr %s449, 2
      %s451 = smul.addr %s447, 32
      %s452 = sadd.s32 %s450, %s451
      %s453 = smul.addr %s452, 8
      %s454 = scalar_lea.vmem %s0, %s453
      %s455 = smul.u32 4, %s25
      %s456 = smul.u32 %s25, 4
      %s457 = ssub.s32 %s456, 1
      %p458 = scmp.gt.s32.totalorder %s457, 0
      %s459 = scalar_select %p458, %s457, 0
      %p460 = scmp.lt.s32.totalorder %s24, 1
      %s461 = scalar_select %p460, %s24, 1
      %p462 = scmp.lt.s32.totalorder %s459, 15
      %s463 = scalar_select %p462, %s459, 15
      %s464 = smul.addr %s463, 2
      %s465 = smul.addr %s461, 32
      %s466 = sadd.s32 %s464, %s465
      %s467 = smul.addr %s466, 8
      %s468 = scalar_lea.vmem %s1, %s467
      %s469 = smul.u32 %s25, 4
      %s470 = ssub.s32 %s469, 1
      %p471 = scmp.gt.s32.totalorder %s470, 0
      %s472 = scalar_select %p471, %s470, 0
      %s473 = sadd.s32 %s25, 1
      %s474 = smul.u32 %s473, 4
      %p475 = scmp.lt.s32.totalorder %s474, 15
      %s476 = scalar_select %p475, %s474, 15
      %p477 = scmp.lt.s32.totalorder %s24, 1
      %s478 = scalar_select %p477, %s24, 1
      %p479 = scmp.lt.s32.totalorder %s476, 15
      %s480 = scalar_select %p479, %s476, 15
      %s481 = smul.addr %s480, 2
      %s482 = smul.addr %s478, 32
      %s483 = sadd.s32 %s481, %s482
      %s484 = smul.addr %s483, 8
      %s485 = scalar_lea.vmem %s2, %s484
      %s486 = sadd.s32 %s25, 1
      %s487 = smul.u32 %s486, 4
      %p488 = scmp.lt.s32.totalorder %s487, 15
      %s489 = scalar_select %p488, %s487, 15
      %s490 = smul.u32 4, %s25
      %p491 = scmp.lt.s32.totalorder %s24, 1
      %s492 = scalar_select %p491, %s24, 1
      %p493 = scmp.lt.s32.totalorder %s490, 15
      %s494 = scalar_select %p493, %s490, 15
      %s495 = smul.addr %s494, 2
      %s496 = smul.addr %s492, 32
      %s497 = sadd.s32 %s495, %s496
      %s498 = smul.addr %s497, 8
      %s499 = scalar_lea.vmem %s9, %s498
      %s500 = smul.u32 4, %s25
      %v501 = vld [vmem:[%s3] sm:$0xf]
      %v502 = vld [vmem:[%s4] sm:$0x1]
      %v503 = vld [vmem:[%s5] sm:$0x1]
      %v504 = vld [vmem:[%s454] sm:$0xff]
      %v505 = vld [vmem:[%s454 + $0x8] sm:$0xff]
      %v506 = vld [vmem:[%s454 + $0x10] sm:$0xff]
      %v507 = vld [vmem:[%s454 + $0x18] sm:$0xff]
      %v508 = vld [vmem:[%s454 + $0x20] sm:$0xff]
      %v509 = vld [vmem:[%s454 + $0x28] sm:$0xff]
      %v510 = vld [vmem:[%s454 + $0x30] sm:$0xff]
      %v511 = vld [vmem:[%s454 + $0x38] sm:$0xff]
      %vm512 = vcmask 31744
      %v514 = vsel %vm512, %v504, 0
      %v517 = vsel %vm512, %v505, 0
      %v520 = vsel %vm512, %v506, 0
      %v523 = vsel %vm512, %v507, 0
      %v526 = vsel %vm512, %v508, 0
      %v529 = vsel %vm512, %v509, 0
      %v532 = vsel %vm512, %v510, 0
      %v535 = vsel %vm512, %v511, 0
      %vm537 = vcmask 1043456
      %v539 = vsel %vm537, %v501, 0
      %541 = vmatpush.msra.mxu0 0.0
      %542 = vmatpush.msra.mxu0 0.0
      %543 = vmatpush.msra.mxu0 0.0
      %544 = vmatpush.msra.mxu0 0.0
      %545 = vmatpush.msra.mxu0 0.0
      %546 = vmatpush.msra.mxu0 0.0
      %547 = vmatpush.msra.mxu0 0.0
      %548 = vmatpush.msra.mxu0 0.0
      %549 = vmatpush.msra.mxu0 0.0
      %550 = vmatpush.msra.mxu0 0.0
      %551 = vmatpush.msra.mxu0 0.0
      %552 = vmatpush.msra.mxu0 0.0
      %553 = vmatpush.msra.mxu0 0.0
      %554 = vmatpush.msra.mxu0 0.0
      %555 = vmatpush.msra.mxu0 0.0
      %556 = vmatpush.msra.mxu0 %v539
      %557 = vmatmul.f32.gmra.mxu0 %v514
      %v558 = vpop.f32.mrf.mxu0
      %v559 = vadd.f32 0.0, %v558
      %560 = vmatmul.f32.gmra.mxu0 %v517
      %v561 = vpop.f32.mrf.mxu0
      %v562 = vadd.f32 0.0, %v561
      %563 = vmatmul.f32.gmra.mxu0 %v520
      %v564 = vpop.f32.mrf.mxu0
      %v565 = vadd.f32 0.0, %v564
      %566 = vmatmul.f32.gmra.mxu0 %v523
      %v567 = vpop.f32.mrf.mxu0
      %v568 = vadd.f32 0.0, %v567
      %569 = vmatmul.f32.gmra.mxu0 %v526
      %v570 = vpop.f32.mrf.mxu0
      %v571 = vadd.f32 0.0, %v570
      %572 = vmatmul.f32.gmra.mxu0 %v529
      %v573 = vpop.f32.mrf.mxu0
      %v574 = vadd.f32 0.0, %v573
      %575 = vmatmul.f32.gmra.mxu0 %v532
      %v576 = vpop.f32.mrf.mxu0
      %v577 = vadd.f32 0.0, %v576
      %578 = vmatmul.f32.gmra.mxu0 %v535
      %v579 = vpop.f32.mrf.mxu0
      %v580 = vadd.f32 0.0, %v579
      %581 = vdwg.mxu0
      %v583 = vperm.slane %v502, 0
      %v585 = vmul.f32 %v559, %v583
      %v586 = vmul.f32 %v562, %v583
      %v587 = vmul.f32 %v565, %v583
      %v588 = vmul.f32 %v568, %v583
      %v589 = vmul.f32 %v571, %v583
      %v590 = vmul.f32 %v574, %v583
      %v591 = vmul.f32 %v577, %v583
      %v592 = vmul.f32 %v580, %v583
      %v594 = vperm.slane %v503, 0
      %v596 = vadd.f32 %v585, %v594
      %v597 = vadd.f32 %v586, %v594
      %v598 = vadd.f32 %v587, %v594
      %v599 = vadd.f32 %v588, %v594
      %v600 = vadd.f32 %v589, %v594
      %v601 = vadd.f32 %v590, %v594
      %v602 = vadd.f32 %v591, %v594
      %v603 = vadd.f32 %v592, %v594
      %v604 = vmax.f32 %v596, 0.0
      %v605 = vmax.f32 %v597, 0.0
      %v606 = vmax.f32 %v598, 0.0
      %v607 = vmax.f32 %v599, 0.0
      %v608 = vmax.f32 %v600, 0.0
      %v609 = vmax.f32 %v601, 0.0
      %v610 = vmax.f32 %v602, 0.0
      %v611 = vmax.f32 %v603, 0.0
      %v612 = vld [vmem:[%s468] sm:$0xff]
      %v613 = vld [vmem:[%s468 + $0x8] sm:$0xff]
      %v615 = vsel %vm512, %v612, 0
      %v618 = vsel %vm512, %v613, 0
      %620 = vmatpush.msra.mxu0 0.0
      %621 = vmatpush.msra.mxu0 0.0
      %622 = vmatpush.msra.mxu0 0.0
      %623 = vmatpush.msra.mxu0 0.0
      %624 = vmatpush.msra.mxu0 0.0
      %625 = vmatpush.msra.mxu0 0.0
      %626 = vmatpush.msra.mxu0 0.0
      %627 = vmatpush.msra.mxu0 0.0
      %628 = vmatpush.msra.mxu0 0.0
      %629 = vmatpush.msra.mxu0 0.0
      %630 = vmatpush.msra.mxu0 0.0
      %631 = vmatpush.msra.mxu0 0.0
      %632 = vmatpush.msra.mxu0 0.0
      %633 = vmatpush.msra.mxu0 0.0
      %634 = vmatpush.msra.mxu0 0.0
      %635 = vmatpush.msra.mxu0 %v539
      %636 = vmatmul.f32.gmra.mxu0 %v615
      %v637 = vpop.f32.mrf.mxu0
      %v638 = vadd.f32 0.0, %v637
      %639 = vmatmul.f32.gmra.mxu0 %v618
      %v640 = vpop.f32.mrf.mxu0
      %v641 = vadd.f32 0.0, %v640
      %642 = vdwg.mxu0
      %v643 = vmul.f32 %v638, %v583
      %v644 = vmul.f32 %v641, %v583
      %v645 = vadd.f32 %v643, %v594
      %v646 = vadd.f32 %v644, %v594
      %v647 = vmax.f32 %v645, 0.0
      %v648 = vmax.f32 %v646, 0.0
      %v649 = vld [vmem:[%s485] sm:$0xff]
      %v650 = vld [vmem:[%s485 + $0x8] sm:$0xff]
      %v652 = vsel %vm512, %v649, 0
      %v655 = vsel %vm512, %v650, 0
      %657 = vmatpush.msra.mxu0 0.0
      %658 = vmatpush.msra.mxu0 0.0
      %659 = vmatpush.msra.mxu0 0.0
      %660 = vmatpush.msra.mxu0 0.0
      %661 = vmatpush.msra.mxu0 0.0
      %662 = vmatpush.msra.mxu0 0.0
      %663 = vmatpush.msra.mxu0 0.0
      %664 = vmatpush.msra.mxu0 0.0
      %665 = vmatpush.msra.mxu0 0.0
      %666 = vmatpush.msra.mxu0 0.0
      %667 = vmatpush.msra.mxu0 0.0
      %668 = vmatpush.msra.mxu0 0.0
      %669 = vmatpush.msra.mxu0 0.0
      %670 = vmatpush.msra.mxu0 0.0
      %671 = vmatpush.msra.mxu0 0.0
      %672 = vmatpush.msra.mxu0 %v539
      %673 = vmatmul.f32.gmra.mxu0 %v652
      %v674 = vpop.f32.mrf.mxu0
      %v675 = vadd.f32 0.0, %v674
      %676 = vmatmul.f32.gmra.mxu0 %v655
      %v677 = vpop.f32.mrf.mxu0
      %v678 = vadd.f32 0.0, %v677
      %679 = vdwg.mxu0
      %v680 = vmul.f32 %v675, %v583
      %v681 = vmul.f32 %v678, %v583
      %v682 = vadd.f32 %v680, %v594
      %v683 = vadd.f32 %v681, %v594
      %v684 = vmax.f32 %v682, 0.0
      %v685 = vmax.f32 %v683, 0.0
      %p686 = scmp.gt.s32.totalorder %s25, 0
      %s687 = scalar_select %p686, 1, 0
      %v688 = vstv %s687
      %vm689 = vcmp.eq.s32.totalorder %v688, 1
      %v690 = vsel %vm689, %v647, 0.0
      %v691 = vsel %vm689, %v648, 0.0
      %p692 = scmp.lt.s32.totalorder %s25, 3
      %s693 = scalar_select %p692, 1, 0
      %v694 = vstv %s693
      %vm695 = vcmp.eq.s32.totalorder %v694, 1
      %v696 = vsel %vm695, %v684, 0.0
      %v697 = vsel %vm695, %v685, 0.0
      %vm710 = vcmask 1040384
      %v711 = vrot.slane %v690, 7
      %v712 = vrot.slane %v691, 7
      %v713 = vsel %vm710, %v711, %v712
      %v714 = vrot.slane %v604, 7
      %v715 = vrot.slane %v605, 7
      %v716 = vsel %vm710, %v714, %v715
      %v717 = vrot.slane %v606, 7
      %v718 = vrot.slane %v607, 7
      %v719 = vsel %vm710, %v717, %v718
      %v720 = vrot.slane %v608, 7
      %v721 = vrot.slane %v609, 7
      %v722 = vsel %vm710, %v720, %v721
      %v723 = vrot.slane %v610, 7
      %v724 = vrot.slane %v611, 7
      %v725 = vsel %vm710, %v723, %v724
      %v726 = vrot.slane %v696, 7
      %v727 = vrot.slane %v697, 7
      %v728 = vsel %vm710, %v726, %v727
      %v741 = vsel %vm710, 0.0, %v711
      %v742 = vsel %vm710, 0.0, %v714
      %v743 = vsel %vm710, 0.0, %v717
      %v744 = vsel %vm710, 0.0, %v720
      %v745 = vsel %vm710, 0.0, %v723
      %v746 = vsel %vm710, 0.0, %v726
      %vm747 = vcmask 1046528
      %v748 = vrot.slane %v690, 1
      %v749 = vrot.slane %v691, 1
      %v750 = vsel %vm747, %v748, %v749
      %v751 = vrot.slane %v604, 1
      %v752 = vrot.slane %v605, 1
      %v753 = vsel %vm747, %v751, %v752
      %v754 = vrot.slane %v606, 1
      %v755 = vrot.slane %v607, 1
      %v756 = vsel %vm747, %v754, %v755
      %v757 = vrot.slane %v608, 1
      %v758 = vrot.slane %v609, 1
      %v759 = vsel %vm747, %v757, %v758
      %v760 = vrot.slane %v610, 1
      %v761 = vrot.slane %v611, 1
      %v762 = vsel %vm747, %v760, %v761
      %v763 = vrot.slane %v696, 1
      %v764 = vrot.slane %v697, 1
      %v765 = vsel %vm747, %v763, %v764
      %v778 = vsel %vm747, %v749, 0.0
      %v779 = vsel %vm747, %v752, 0.0
      %v780 = vsel %vm747, %v755, 0.0
      %v781 = vsel %vm747, %v758, 0.0
      %v782 = vsel %vm747, %v761, 0.0
      %v783 = vsel %vm747, %v764, 0.0
      %v784 = vld [vmem:[%s6] sm:$0xff]
      %v785 = vld [vmem:[%s6 + $0x8] sm:$0x1]
      %v786 = vld [vmem:[%s7] sm:$0x1]
      %v787 = vld [vmem:[%s8] sm:$0x1]
      %788 = vst.msk [vmem:[%s499] sm:$0xff] %vm512, %v604
      %789 = vst.msk [vmem:[%s499 + $0x8] sm:$0xff] %vm512, %v605
      %790 = vst.msk [vmem:[%s499 + $0x10] sm:$0xff] %vm512, %v606
      %791 = vst.msk [vmem:[%s499 + $0x18] sm:$0xff] %vm512, %v607
      %792 = vst.msk [vmem:[%s499 + $0x20] sm:$0xff] %vm512, %v608
      %793 = vst.msk [vmem:[%s499 + $0x28] sm:$0xff] %vm512, %v609
      %794 = vst.msk [vmem:[%s499 + $0x30] sm:$0xff] %vm512, %v610
      %795 = vst.msk [vmem:[%s499 + $0x38] sm:$0xff] %vm512, %v611
      %v796 = vperm.slane %v784, 0
      %v797 = vmul.f32 %v741, %v796
      %v798 = vmul.f32 %v713, %v796
      %v799 = vmul.f32 %v742, %v796
      %v800 = vmul.f32 %v716, %v796
      %v801 = vmul.f32 %v743, %v796
      %v802 = vmul.f32 %v719, %v796
      %v803 = vmul.f32 %v744, %v796
      %v804 = vmul.f32 %v722, %v796
      %v805 = vadd.f32 %v797, 0.0
      %v806 = vadd.f32 %v798, 0.0
      %v807 = vadd.f32 %v799, 0.0
      %v808 = vadd.f32 %v800, 0.0
      %v809 = vadd.f32 %v801, 0.0
      %v810 = vadd.f32 %v802, 0.0
      %v811 = vadd.f32 %v803, 0.0
      %v812 = vadd.f32 %v804, 0.0
      %v813 = vperm.slane %v784, 1
      %v814 = vmul.f32 %v690, %v813
      %v815 = vmul.f32 %v691, %v813
      %v816 = vmul.f32 %v604, %v813
      %v817 = vmul.f32 %v605, %v813
      %v818 = vmul.f32 %v606, %v813
      %v819 = vmul.f32 %v607, %v813
      %v820 = vmul.f32 %v608, %v813
      %v821 = vmul.f32 %v609, %v813
      %v822 = vadd.f32 %v805, %v814
      %v823 = vadd.f32 %v806, %v815
      %v824 = vadd.f32 %v807, %v816
      %v825 = vadd.f32 %v808, %v817
      %v826 = vadd.f32 %v809, %v818
      %v827 = vadd.f32 %v810, %v819
      %v828 = vadd.f32 %v811, %v820
      %v829 = vadd.f32 %v812, %v821
      %v830 = vperm.slane %v784, 2
      %v831 = vmul.f32 %v750, %v830
      %v832 = vmul.f32 %v778, %v830
      %v833 = vmul.f32 %v753, %v830
      %v834 = vmul.f32 %v779, %v830
      %v835 = vmul.f32 %v756, %v830
      %v836 = vmul.f32 %v780, %v830
      %v837 = vmul.f32 %v759, %v830
      %v838 = vmul.f32 %v781, %v830
      %v839 = vadd.f32 %v822, %v831
      %v840 = vadd.f32 %v823, %v832
      %v841 = vadd.f32 %v824, %v833
      %v842 = vadd.f32 %v825, %v834
      %v843 = vadd.f32 %v826, %v835
      %v844 = vadd.f32 %v827, %v836
      %v845 = vadd.f32 %v828, %v837
      %v846 = vadd.f32 %v829, %v838
      %v847 = vperm.slane %v784, 3
      %v848 = vmul.f32 %v742, %v847
      %v849 = vmul.f32 %v716, %v847
      %v850 = vmul.f32 %v743, %v847
      %v851 = vmul.f32 %v719, %v847
      %v852 = vmul.f32 %v744, %v847
      %v853 = vmul.f32 %v722, %v847
      %v854 = vmul.f32 %v745, %v847
      %v855 = vmul.f32 %v725, %v847
      %v856 = vadd.f32 %v839, %v848
      %v857 = vadd.f32 %v840, %v849
      %v858 = vadd.f32 %v841, %v850
      %v859 = vadd.f32 %v842, %v851
      %v860 = vadd.f32 %v843, %v852
      %v861 = vadd.f32 %v844, %v853
      %v862 = vadd.f32 %v845, %v854
      %v863 = vadd.f32 %v846, %v855
      %v864 = vperm.slane %v784, 4
      %v865 = vmul.f32 %v604, %v864
      %v866 = vmul.f32 %v605, %v864
      %v867 = vmul.f32 %v606, %v864
      %v868 = vmul.f32 %v607, %v864
      %v869 = vmul.f32 %v608, %v864
      %v870 = vmul.f32 %v609, %v864
      %v871 = vmul.f32 %v610, %v864
      %v872 = vmul.f32 %v611, %v864
      %v873 = vadd.f32 %v856, %v865
      %v874 = vadd.f32 %v857, %v866
      %v875 = vadd.f32 %v858, %v867
      %v876 = vadd.f32 %v859, %v868
      %v877 = vadd.f32 %v860, %v869
      %v878 = vadd.f32 %v861, %v870
      %v879 = vadd.f32 %v862, %v871
      %v880 = vadd.f32 %v863, %v872
      %v881 = vperm.slane %v784, 5
      %v882 = vmul.f32 %v753, %v881
      %v883 = vmul.f32 %v779, %v881
      %v884 = vmul.f32 %v756, %v881
      %v885 = vmul.f32 %v780, %v881
      %v886 = vmul.f32 %v759, %v881
      %v887 = vmul.f32 %v781, %v881
      %v888 = vmul.f32 %v762, %v881
      %v889 = vmul.f32 %v782, %v881
      %v890 = vadd.f32 %v873, %v882
      %v891 = vadd.f32 %v874, %v883
      %v892 = vadd.f32 %v875, %v884
      %v893 = vadd.f32 %v876, %v885
      %v894 = vadd.f32 %v877, %v886
      %v895 = vadd.f32 %v878, %v887
      %v896 = vadd.f32 %v879, %v888
      %v897 = vadd.f32 %v880, %v889
      %v898 = vperm.slane %v784, 6
      %v899 = vmul.f32 %v743, %v898
      %v900 = vmul.f32 %v719, %v898
      %v901 = vmul.f32 %v744, %v898
      %v902 = vmul.f32 %v722, %v898
      %v903 = vmul.f32 %v745, %v898
      %v904 = vmul.f32 %v725, %v898
      %v905 = vmul.f32 %v746, %v898
      %v906 = vmul.f32 %v728, %v898
      %v907 = vadd.f32 %v890, %v899
      %v908 = vadd.f32 %v891, %v900
      %v909 = vadd.f32 %v892, %v901
      %v910 = vadd.f32 %v893, %v902
      %v911 = vadd.f32 %v894, %v903
      %v912 = vadd.f32 %v895, %v904
      %v913 = vadd.f32 %v896, %v905
      %v914 = vadd.f32 %v897, %v906
      %v915 = vperm.slane %v784, 7
      %v916 = vmul.f32 %v606, %v915
      %v917 = vmul.f32 %v607, %v915
      %v918 = vmul.f32 %v608, %v915
      %v919 = vmul.f32 %v609, %v915
      %v920 = vmul.f32 %v610, %v915
      %v921 = vmul.f32 %v611, %v915
      %v922 = vmul.f32 %v696, %v915
      %v923 = vmul.f32 %v697, %v915
      %v924 = vadd.f32 %v907, %v916
      %v925 = vadd.f32 %v908, %v917
      %v926 = vadd.f32 %v909, %v918
      %v927 = vadd.f32 %v910, %v919
      %v928 = vadd.f32 %v911, %v920
      %v929 = vadd.f32 %v912, %v921
      %v930 = vadd.f32 %v913, %v922
      %v931 = vadd.f32 %v914, %v923
      %v932 = vperm.slane %v785, 0
      %v933 = vmul.f32 %v756, %v932
      %v934 = vmul.f32 %v780, %v932
      %v935 = vmul.f32 %v759, %v932
      %v936 = vmul.f32 %v781, %v932
      %v937 = vmul.f32 %v762, %v932
      %v938 = vmul.f32 %v782, %v932
      %v939 = vmul.f32 %v765, %v932
      %v940 = vmul.f32 %v783, %v932
      %v941 = vadd.f32 %v924, %v933
      %v942 = vadd.f32 %v925, %v934
      %v943 = vadd.f32 %v926, %v935
      %v944 = vadd.f32 %v927, %v936
      %v945 = vadd.f32 %v928, %v937
      %v946 = vadd.f32 %v929, %v938
      %v947 = vadd.f32 %v930, %v939
      %v948 = vadd.f32 %v931, %v940
      %v950 = vperm.slane %v786, 0
      %v952 = vmul.f32 %v941, %v950
      %v953 = vmul.f32 %v942, %v950
      %v954 = vmul.f32 %v943, %v950
      %v955 = vmul.f32 %v944, %v950
      %v956 = vmul.f32 %v945, %v950
      %v957 = vmul.f32 %v946, %v950
      %v958 = vmul.f32 %v947, %v950
      %v959 = vmul.f32 %v948, %v950
      %v961 = vperm.slane %v787, 0
      %v963 = vadd.f32 %v952, %v961
      %v964 = vadd.f32 %v953, %v961
      %v965 = vadd.f32 %v954, %v961
      %v966 = vadd.f32 %v955, %v961
      %v967 = vadd.f32 %v956, %v961
      %v968 = vadd.f32 %v957, %v961
      %v969 = vadd.f32 %v958, %v961
      %v970 = vadd.f32 %v959, %v961
      %v971 = vmax.f32 %v963, 0.0
      %v972 = vmax.f32 %v964, 0.0
      %v973 = vmax.f32 %v965, 0.0
      %v974 = vmax.f32 %v966, 0.0
      %v975 = vmax.f32 %v967, 0.0
      %v976 = vmax.f32 %v968, 0.0
      %v977 = vmax.f32 %v969, 0.0
      %v978 = vmax.f32 %v970, 0.0
      %987 = vrot.lane.b32.xlu0 %v971, 4
      %v988 = vpop.permute.xlu0 %987
      %989 = vrot.lane.b32.xlu0 %v972, 4
      %v990 = vpop.permute.xlu0 %989
      %991 = vrot.lane.b32.xlu0 %v973, 4
      %v992 = vpop.permute.xlu0 %991
      %993 = vrot.lane.b32.xlu0 %v974, 4
      %v994 = vpop.permute.xlu0 %993
      %995 = vrot.lane.b32.xlu0 %v975, 4
      %v996 = vpop.permute.xlu0 %995
      %997 = vrot.lane.b32.xlu0 %v976, 4
      %v998 = vpop.permute.xlu0 %997
      %999 = vrot.lane.b32.xlu0 %v977, 4
      %v1000 = vpop.permute.xlu0 %999
      %1001 = vrot.lane.b32.xlu0 %v978, 4
      %v1002 = vpop.permute.xlu0 %1001
      %vm1011 = vcmask 64544
      %1012 = vst.msk [vmem:[%s499] sm:$0xff] %vm1011, %v988
      %1013 = vst.msk [vmem:[%s499 + $0x8] sm:$0xff] %vm1011, %v990
      %1014 = vst.msk [vmem:[%s499 + $0x10] sm:$0xff] %vm1011, %v992
      %1015 = vst.msk [vmem:[%s499 + $0x18] sm:$0xff] %vm1011, %v994
      %1016 = vst.msk [vmem:[%s499 + $0x20] sm:$0xff] %vm1011, %v996
      %1017 = vst.msk [vmem:[%s499 + $0x28] sm:$0xff] %vm1011, %v998
      %1018 = vst.msk [vmem:[%s499 + $0x30] sm:$0xff] %vm1011, %v1000
      %1019 = vst.msk [vmem:[%s499 + $0x38] sm:$0xff] %vm1011, %v1002
      %s1020 = smul.u32 4, %s25
      %p1021 = scmp.lt.s32.totalorder %s24, 1
      %s1022 = scalar_select %p1021, %s24, 1
      %p1023 = scmp.lt.s32.totalorder %s1020, 15
      %s1024 = scalar_select %p1023, %s1020, 15
      %s1025 = smul.addr %s1024, 2
      %s1026 = smul.addr %s1022, 32
      %s1027 = sadd.s32 %s1025, %s1026
      %s1028 = smul.addr %s1027, 8
      %s1029 = scalar_lea.vmem %s9, %s1028
      // Predicated region
      $region57: #{tpu_custom_call.1} parent=55 // pred_check
        %p1030 = pneg %p278
      $region58: #{tpu_custom_call.1} parent=55 // pred_check_branch
        %1032 = sbr.rel (%p1030) target = $region60
      $region59: #{tpu_custom_call.1} parent=55 // pred_region
        %s1033 = smul.u32 4, %s25
      $region60: #{tpu_custom_call.1} parent=55 // pred_fallthru
        _
    $region56: #{tpu_custom_call.1} parent=5 // pred_fallthru
      _
    %p1034 = scmp.le.s32.totalorder 2, %s15
    // Predicated region
    $region61: #{tpu_custom_call.1} parent=5 // pred_check
      %p1035 = pneg %p1034
    $region62: #{tpu_custom_call.1} parent=5 // pred_check_branch
      %1037 = sbr.rel (%p1035) target = $region64
    $region63: #{tpu_custom_call.1} parent=5 // pred_region
      %s1038 = ssub.s32 %s15, 2
      // Predicated region
      $region65: #{tpu_custom_call.1} parent=63 // pred_check
        %p1039 = pneg %p284
      $region66: #{tpu_custom_call.1} parent=63 // pred_check_branch
        %1041 = sbr.rel (%p1039) target = $region68
      $region67: #{tpu_custom_call.1} parent=63 // pred_region
        %s1042 = smul.u32 4, %s27
        %p1043 = scmp.lt.s32.totalorder %s26, 1
        %s1044 = scalar_select %p1043, %s26, 1
        %p1045 = scmp.lt.s32.totalorder %s1042, 15
        %s1046 = scalar_select %p1045, %s1042, 15
        %s1047 = smul.addr %s1046, 2
        %s1048 = smul.addr %s1044, 32
        %s1049 = sadd.s32 %s1047, %s1048
        %s1050 = smul.addr %s1049, 8
        %s1051 = scalar_lea.vmem %s9, %s1050
      $region68: #{tpu_custom_call.1} parent=63 // pred_fallthru
        _
    $region64: #{tpu_custom_call.1} parent=5 // pred_fallthru
      _
  $region6: #{tpu_custom_call.1} parent=0 // loop_footer
    %s19 = sadd.s32 1, %s15
  $region7: #{tpu_custom_call.1} parent=0 // loop_footer_branch
    %14 = sbr.rel target = $region3
  $region8: #{tpu_custom_call.1} parent=0 // loop_exit
    _

</llo_original>
